<compile_context>
chip_gen: v7x
topology: tpu7x:2x2x1
jax: 0.10.0
libtpu: 0.0.40
codegen_flags: <defaults>
</compile_context>

<pallas_src>
import jax
import jax.numpy as jnp
from jax.experimental import pallas as pl
from jax.experimental.pallas import tpu as pltpu


def _round_up(n, m):
    return ((n + m - 1) // m) * m


def _mlp_kernel(x_ref,
                w1_ref, b1_ref,
                w2_ref, b2_ref,
                w3_ref, b3_ref,
                w4_ref, b4_ref,
                o_ref):
    """One batch tile: (TB, D) f32 in -> (1, TB) f32 probabilities out."""
    x = x_ref[...]                                         # (TB, D)

    # Layer 1 (batch-major): (TB, D) @ (D, 128) -> (TB, 128).
    h1 = jnp.dot(x, w1_ref[...], preferred_element_type=jnp.float32)
    h1 = jnp.maximum(h1 + b1_ref[...], 0.0)                # bias + ReLU
    # Dropout(0.6): identity in eval/inference mode.

    # Layer 2: switch to feature-major by contracting the 128-feature axis of
    # both operands (dot(A, B^T) MXU form, no materialized transpose):
    # (64, 128) x (TB, 128)^T -> (64, TB).
    h2 = jax.lax.dot_general(w2_ref[...], h1,
                             (((1,), (1,)), ((), ())),
                             preferred_element_type=jnp.float32)
    h2 = jnp.maximum(h2 + b2_ref[...], 0.0)
    # Dropout(0.5): identity in eval/inference mode.

    # Layer 3 (feature-major): (32, 64) @ (64, TB) -> (32, TB).
    h3 = jnp.dot(w3_ref[...], h2, preferred_element_type=jnp.float32)
    h3 = jnp.maximum(h3 + b3_ref[...], 0.0)

    # Head (32 -> 1): VPU multiply + sublane (XLU) reduction instead of an
    # N=1 MXU matmul; the (1, TB) result is already lane-dense for the store.
    logits = jnp.sum(h3 * w4_ref[...], axis=0, keepdims=True) + b4_ref[...]
    o_ref[...] = jax.nn.sigmoid(logits).astype(o_ref.dtype)


def heart_disease_nn_forward(x, params, *, tb=4096):
    """x: (B, input_dim) float32, batch-major (PyTorch layout). -> (B, 1) f32."""
    B, D = x.shape
    w1, b1 = params["w1"], params["b1"]   # (D, 128),  (1, 128)
    w2, b2 = params["w2"], params["b2"]   # (64, 128), (64, 1)
    w3, b3 = params["w3"], params["b3"]   # (32, 64),  (32, 1)
    w4, b4 = params["w4"], params["b4"]   # (32, 1),   (1, 1)

    # Batch tile: always a multiple of 128 (lane-dense output store), and
    # capped so the grid has >=2 steps whenever the batch allows it (lets the
    # "parallel" batch axis use both TensorCores on v7x).
    tb = max(128, _round_up(int(tb), 128))
    tb = min(tb, max(128, _round_up(pl.cdiv(max(B, 1), 2), 128)))

    # Tiny-batch path only: pad up to one tile so the single block is fully
    # in bounds.  For B >= tb there is NO extra pass over x; the (possibly
    # partial) last block is handled by Pallas and the padded output columns
    # are sliced off below (each batch column is independent).
    if B < tb:
        x = jnp.pad(x, ((0, tb - B), (0, 0)))

    grid_b = pl.cdiv(B, tb)
    width = grid_b * tb          # output lanes (>= B): all output blocks full,
                                 # so every store is an unmasked vst.

    resident = lambda arr: pl.BlockSpec(arr.shape, lambda i: (0, 0))

    flops = 2 * width * (D * 128 + 128 * 64 + 64 * 32 + 32)
    bytes_accessed = (int(x.size) * x.dtype.itemsize + width * 4
                      + sum(int(a.size) * a.dtype.itemsize
                            for a in (w1, b1, w2, b2, w3, b3, w4, b4)))

    out = pl.pallas_call(
        _mlp_kernel,
        out_shape=jax.ShapeDtypeStruct((1, width), jnp.float32),
        grid=(grid_b,),
        in_specs=[
            pl.BlockSpec((tb, D), lambda i: (i, 0)),        # streamed x tiles
            resident(w1), resident(b1),
            resident(w2), resident(b2),
            resident(w3), resident(b3),
            resident(w4), resident(b4),
        ],
        out_specs=pl.BlockSpec((1, tb), lambda i: (0, i)),   # lane-dense store
        compiler_params=pltpu.CompilerParams(
            dimension_semantics=("parallel",),
            vmem_limit_bytes=32 * 1024 * 1024),
        cost_estimate=pl.CostEstimate(
            flops=flops, transcendentals=width,
            bytes_accessed=bytes_accessed),
    )(x, w1, b1, w2, b2, w3, b3, w4, b4)

    return out[0, :B].reshape(B, 1)


def init_params(input_dim, key):
    """nn.Linear-style U(-1/sqrt(fan_in), 1/sqrt(fan_in)) init, all float32.

    Layouts chosen for the kernel:
      w1: (in, out)  = (D, 128)   layer 1 runs batch-major
      w2: (out, in)  = (64, 128)  contracted against batch-major h1
      w3: (out, in)  = (32, 64)   feature-major matmul
      w4: (in, 1)    = (32, 1)    VPU + XLU head
      b1: (1, 128) row; b2/b3: (out, 1) columns; b4: (1, 1).
    """
    d = input_dim
    specs = {
        "w1": ((d, 128), d),   "b1": ((1, 128), d),
        "w2": ((64, 128), 128), "b2": ((64, 1), 128),
        "w3": ((32, 64), 64),   "b3": ((32, 1), 64),
        "w4": ((32, 1), 32),    "b4": ((1, 1), 32),
    }
    params = {}
    keys = jax.random.split(key, len(specs))
    for k, (name, (shape, fan_in)) in zip(keys, specs.items()):
        bound = 1.0 / float(fan_in) ** 0.5
        params[name] = jax.random.uniform(k, shape, minval=-bound,
                                          maxval=bound, dtype=jnp.float32)
    return params


def ref_forward(x, p):
    """Pure-JAX f32 reference with PyTorch semantics (eval mode)."""
    h = jnp.maximum(x @ p["w1"] + p["b1"], 0.0)
    h = jnp.maximum(h @ p["w2"].T + p["b2"].T, 0.0)
    h = jnp.maximum(h @ p["w3"].T + p["b3"].T, 0.0)
    logits = h @ p["w4"] + p["b4"]
    return jax.nn.sigmoid(logits)


if __name__ == "__main__":
    key = jax.random.PRNGKey(0)
    k_x, k_p = jax.random.split(key)

    batch = 256      # small, but gives a 2-step grid (exercises the pipeline)
    input_dim = 13   # typical heart-disease feature count (X_train.shape[1])

    x = jax.random.normal(k_x, (batch, input_dim), dtype=jnp.float32)
    params = init_params(input_dim, k_p)

    out = heart_disease_nn_forward(x, params)
    jax.block_until_ready(out)

    expected = ref_forward(x, params)
    assert out.shape == (batch, 1), out.shape
    max_err = float(jnp.max(jnp.abs(out - expected)))
    # Tolerance covers possible differences in f32 matmul decomposition
    # between the MXU kernel and the XLA reference.
    assert max_err < 2e-3, max_err

    print("KERNEL_OK")
</pallas_src>

<mosaic_0001>
module attributes {stable_mosaic.version = 11 : i64} {
  func.func @_mlp_kernel(%arg0: i32, %arg1: memref<128x13xf32, #tpu.memory_space<vmem>>, %arg2: memref<13x128xf32, #tpu.memory_space<vmem>>, %arg3: memref<1x128xf32, #tpu.memory_space<vmem>>, %arg4: memref<64x128xf32, #tpu.memory_space<vmem>>, %arg5: memref<64x1xf32, #tpu.memory_space<vmem>>, %arg6: memref<32x64xf32, #tpu.memory_space<vmem>>, %arg7: memref<32x1xf32, #tpu.memory_space<vmem>>, %arg8: memref<32x1xf32, #tpu.memory_space<vmem>>, %arg9: memref<1x1xf32, #tpu.memory_space<vmem>>, %arg10: memref<1x128xf32, #tpu.memory_space<vmem>>) attributes {dimension_semantics = [#tpu.dimension_semantics<parallel>], iteration_bounds = array<i64: 2>, scalar_prefetch = 0 : i64, scratch_operands = 0 : i64, tpu.core_type = #tpu.core_type<tc>, window_params = [{transform_indices = @transform_0, window_bounds = array<i64: 128, 13>}, {pipeline_mode = #tpu.pipeline_mode<synchronous>, transform_indices = @transform_1, window_bounds = array<i64: 13, 128>}, {pipeline_mode = #tpu.pipeline_mode<synchronous>, transform_indices = @transform_2, window_bounds = array<i64: 1, 128>}, {pipeline_mode = #tpu.pipeline_mode<synchronous>, transform_indices = @transform_3, window_bounds = array<i64: 64, 128>}, {pipeline_mode = #tpu.pipeline_mode<synchronous>, transform_indices = @transform_4, window_bounds = array<i64: 64, 1>}, {pipeline_mode = #tpu.pipeline_mode<synchronous>, transform_indices = @transform_5, window_bounds = array<i64: 32, 64>}, {pipeline_mode = #tpu.pipeline_mode<synchronous>, transform_indices = @transform_6, window_bounds = array<i64: 32, 1>}, {pipeline_mode = #tpu.pipeline_mode<synchronous>, transform_indices = @transform_7, window_bounds = array<i64: 32, 1>}, {pipeline_mode = #tpu.pipeline_mode<synchronous>, transform_indices = @transform_8, window_bounds = array<i64: 1, 1>}, {transform_indices = @transform_9, window_bounds = array<i64: 1, 128>}]} {
    %c0 = arith.constant 0 : index
    %c0_0 = arith.constant 0 : index
    %0 = vector.load %arg1[%c0, %c0_0] : memref<128x13xf32, #tpu.memory_space<vmem>>, vector<128x13xf32>
    %c0_1 = arith.constant 0 : index
    %c0_2 = arith.constant 0 : index
    %1 = vector.load %arg2[%c0_1, %c0_2] : memref<13x128xf32, #tpu.memory_space<vmem>>, vector<13x128xf32>
    %cst = arith.constant dense<0.000000e+00> : vector<128x128xf32>
    %2 = tpu.matmul %0, %1, %cst {dimension_numbers = #tpu.dot_dimension_numbers<[1], [0], [0], [1], [0, 0, 1, 1], [], []>} : vector<128x13xf32>, vector<13x128xf32>, vector<128x128xf32> -> vector<128x128xf32>
    %c0_3 = arith.constant 0 : index
    %c0_4 = arith.constant 0 : index
    %3 = vector.load %arg3[%c0_3, %c0_4] : memref<1x128xf32, #tpu.memory_space<vmem>>, vector<1x128xf32>
    %4 = vector.broadcast %3 : vector<1x128xf32> to vector<128x128xf32>
    %5 = arith.addf %2, %4 : vector<128x128xf32>
    %cst_5 = arith.constant 0.000000e+00 : f32
    %6 = vector.broadcast %cst_5 : f32 to vector<128x128xf32>
    %7 = arith.maximumf %5, %6 : vector<128x128xf32>
    %c0_6 = arith.constant 0 : index
    %c0_7 = arith.constant 0 : index
    %8 = vector.load %arg4[%c0_6, %c0_7] : memref<64x128xf32, #tpu.memory_space<vmem>>, vector<64x128xf32>
    %cst_8 = arith.constant dense<0.000000e+00> : vector<64x128xf32>
    %9 = tpu.matmul %8, %7, %cst_8 {dimension_numbers = #tpu.dot_dimension_numbers<[1], [1], [0], [0], [0, 0, 1, 0], [], []>} : vector<64x128xf32>, vector<128x128xf32>, vector<64x128xf32> -> vector<64x128xf32>
    %c0_9 = arith.constant 0 : index
    %c0_10 = arith.constant 0 : index
    %10 = vector.load %arg5[%c0_9, %c0_10] : memref<64x1xf32, #tpu.memory_space<vmem>>, vector<64x1xf32>
    %11 = vector.broadcast %10 : vector<64x1xf32> to vector<64x128xf32>
    %12 = arith.addf %9, %11 : vector<64x128xf32>
    %cst_11 = arith.constant 0.000000e+00 : f32
    %13 = vector.broadcast %cst_11 : f32 to vector<64x128xf32>
    %14 = arith.maximumf %12, %13 : vector<64x128xf32>
    %c0_12 = arith.constant 0 : index
    %c0_13 = arith.constant 0 : index
    %15 = vector.load %arg6[%c0_12, %c0_13] : memref<32x64xf32, #tpu.memory_space<vmem>>, vector<32x64xf32>
    %cst_14 = arith.constant dense<0.000000e+00> : vector<32x128xf32>
    %16 = tpu.matmul %15, %14, %cst_14 {dimension_numbers = #tpu.dot_dimension_numbers<[1], [0], [0], [1], [0, 0, 1, 1], [], []>} : vector<32x64xf32>, vector<64x128xf32>, vector<32x128xf32> -> vector<32x128xf32>
    %c0_15 = arith.constant 0 : index
    %c0_16 = arith.constant 0 : index
    %17 = vector.load %arg7[%c0_15, %c0_16] : memref<32x1xf32, #tpu.memory_space<vmem>>, vector<32x1xf32>
    %18 = vector.broadcast %17 : vector<32x1xf32> to vector<32x128xf32>
    %19 = arith.addf %16, %18 : vector<32x128xf32>
    %cst_17 = arith.constant 0.000000e+00 : f32
    %20 = vector.broadcast %cst_17 : f32 to vector<32x128xf32>
    %21 = arith.maximumf %19, %20 : vector<32x128xf32>
    %c0_18 = arith.constant 0 : index
    %c0_19 = arith.constant 0 : index
    %22 = vector.load %arg8[%c0_18, %c0_19] : memref<32x1xf32, #tpu.memory_space<vmem>>, vector<32x1xf32>
    %23 = vector.broadcast %22 : vector<32x1xf32> to vector<32x128xf32>
    %24 = arith.mulf %21, %23 : vector<32x128xf32>
    %cst_20 = arith.constant dense<0.000000e+00> : vector<128xf32>
    %25 = vector.multi_reduction <add>, %24, %cst_20 [0] : vector<32x128xf32> to vector<128xf32>
    %26 = vector.shape_cast %25 : vector<128xf32> to vector<1x128xf32>
    %c0_21 = arith.constant 0 : index
    %c0_22 = arith.constant 0 : index
    %27 = vector.load %arg9[%c0_21, %c0_22] : memref<1x1xf32, #tpu.memory_space<vmem>>, vector<1x1xf32>
    %28 = vector.broadcast %27 : vector<1x1xf32> to vector<1x128xf32>
    %29 = arith.addf %26, %28 : vector<1x128xf32>
    %30 = arith.negf %29 : vector<1x128xf32>
    %31 = math.exp %30 : vector<1x128xf32>
    %cst_23 = arith.constant 1.000000e+00 : f32
    %32 = vector.broadcast %cst_23 : f32 to vector<1x128xf32>
    %33 = arith.addf %32, %31 : vector<1x128xf32>
    %34 = arith.divf %32, %33 : vector<1x128xf32>
    %c0_24 = arith.constant 0 : index
    %c0_25 = arith.constant 0 : index
    %35 = vector.load %arg10[%c0_24, %c0_25] : memref<1x128xf32, #tpu.memory_space<vmem>>, vector<1x128xf32>
    tpu.vector_store %arg10[%c0_24, %c0_25], %34 {strides = array<i32>} : memref<1x128xf32, #tpu.memory_space<vmem>>, vector<1x128xf32>,
    return
  }
  func.func @transform_0(%arg0: i32) -> (i32, i32) {
    %c0_i32 = arith.constant 0 : i32
    %c0_i32_0 = arith.constant 0 : i32
    return %arg0, %c0_i32 : i32, i32
  }
  func.func @transform_1(%arg0: i32) -> (i32, i32) {
    %c0_i32 = arith.constant 0 : i32
    %c0_i32_0 = arith.constant 0 : i32
    %c0_i32_1 = arith.constant 0 : i32
    return %c0_i32, %c0_i32_0 : i32, i32
  }
  func.func @transform_2(%arg0: i32) -> (i32, i32) {
    %c0_i32 = arith.constant 0 : i32
    %c0_i32_0 = arith.constant 0 : i32
    %c0_i32_1 = arith.constant 0 : i32
    return %c0_i32, %c0_i32_0 : i32, i32
  }
  func.func @transform_3(%arg0: i32) -> (i32, i32) {
    %c0_i32 = arith.constant 0 : i32
    %c0_i32_0 = arith.constant 0 : i32
    %c0_i32_1 = arith.constant 0 : i32
    return %c0_i32, %c0_i32_0 : i32, i32
  }
  func.func @transform_4(%arg0: i32) -> (i32, i32) {
    %c0_i32 = arith.constant 0 : i32
    %c0_i32_0 = arith.constant 0 : i32
    %c0_i32_1 = arith.constant 0 : i32
    return %c0_i32, %c0_i32_0 : i32, i32
  }
  func.func @transform_5(%arg0: i32) -> (i32, i32) {
    %c0_i32 = arith.constant 0 : i32
    %c0_i32_0 = arith.constant 0 : i32
    %c0_i32_1 = arith.constant 0 : i32
    return %c0_i32, %c0_i32_0 : i32, i32
  }
  func.func @transform_6(%arg0: i32) -> (i32, i32) {
    %c0_i32 = arith.constant 0 : i32
    %c0_i32_0 = arith.constant 0 : i32
    %c0_i32_1 = arith.constant 0 : i32
    return %c0_i32, %c0_i32_0 : i32, i32
  }
  func.func @transform_7(%arg0: i32) -> (i32, i32) {
    %c0_i32 = arith.constant 0 : i32
    %c0_i32_0 = arith.constant 0 : i32
    %c0_i32_1 = arith.constant 0 : i32
    return %c0_i32, %c0_i32_0 : i32, i32
  }
  func.func @transform_8(%arg0: i32) -> (i32, i32) {
    %c0_i32 = arith.constant 0 : i32
    %c0_i32_0 = arith.constant 0 : i32
    %c0_i32_1 = arith.constant 0 : i32
    return %c0_i32, %c0_i32_0 : i32, i32
  }
  func.func @transform_9(%arg0: i32) -> (i32, i32) {
    %c0_i32 = arith.constant 0 : i32
    %c0_i32_0 = arith.constant 0 : i32
    return %c0_i32, %arg0 : i32, i32
  }
}

</mosaic_0001>

<llo_original>
// kernel: tpu_custom_call.1
$region0: #{tpu_custom_call.1}
  #allocation0 [shape = 'u32[]', space=smem, size = 0x4, offset = 0x4, fixed_abs, tag = 'smem constant byte address 0x4 - core index']
  #allocation1 [shape = 'u32[144,128]{1,0:T(1,128)}', space=vmem, size = 0x12000, scoped, tag = 'internal scratch']
  #allocation2 [shape = 'f32[1,1]{1,0:T(1,128)S(1)}', space=vmem, size = 0x200, scoped, tag = 'scoped memory for tpu_custom_call.1']
  %s0 = inlined_call_operand.vmem [shape: f32[256,13], index: 0, kind: input, shape index: {}]
  %s1 = inlined_call_operand.vmem [shape: f32[13,128], index: 1, kind: input, shape index: {}]
  %s2 = inlined_call_operand.vmem [shape: f32[1,128], index: 2, kind: input, shape index: {}]
  %s3 = inlined_call_operand.vmem [shape: f32[64,128], index: 3, kind: input, shape index: {}]
  %s4 = inlined_call_operand.vmem [shape: f32[64,1], index: 4, kind: input, shape index: {}]
  %s5 = inlined_call_operand.vmem [shape: f32[32,64], index: 5, kind: input, shape index: {}]
  %s6 = inlined_call_operand.vmem [shape: f32[32,1], index: 6, kind: input, shape index: {}]
  %s7 = inlined_call_operand.vmem [shape: f32[32,1], index: 7, kind: input, shape index: {}]
  %s8 = inlined_call_operand.<no memory space> [shape: f32[1,1], index: 8, kind: input, shape index: {}]
  %s9 = inlined_call_operand.hbm [shape: f32[1,256], index: 9, kind: output, shape index: {}]
  %s10 = sld [smem:[#allocation0]]
  $region69: #{tpu_custom_call.1} parent=0
    _
  %s12 = ssub.s32 1, %s10
  %s13 = scalar_select 0, %s12, %s10
  %v14 = vstv %s8
  %15 = vst [vmem:[#allocation2] sm:$0x1] %v14
  $region1: #{tpu_custom_call.1} parent=0
    #allocation3 [shape = 'u8[1024]{0}', space=vmem, size = 0x400, scoped, tag = 'output window, operand 0']
    #allocation4 [shape = 's32[2]{0}', space=sflag, size = 0x8, scoped, tag = 'scoped memory for tpu_custom_call.1']
    %16 = vsyncpa [#allocation4], 0
    %s17 = scalar_lea.sflag [#allocation4], 1
    %18 = vsyncpa %s17, 0
    loop: start=0, step=1, limit=4
    $region2: #{tpu_custom_call.1} parent=1 // loop_pre_header
      _
    $region3: #{tpu_custom_call.1} parent=1 // loop_header
      %s20 = sphi 0, %s24
      %p21 = scmp.ge.s32.totalorder %s20, 4
      %s30 = sphi 0, %s32
      %s33 = sphi 0, %s30
      %s34 = sphi 0, %s33
      %s50 = sphi 0, %s34
      %s54 = sphi 0, %s54
      %s56 = sphi 0, %s54
      %s57 = sphi 0, %s56
      %s71 = sphi 0, %s57
      %s75 = sphi 0, %s75
      %s77 = sphi 0, %s75
      %s78 = sphi 0, %s77
      %s92 = sphi 0, %s78
      %s96 = sphi 0, %s96
      %s98 = sphi 0, %s96
      %s99 = sphi 0, %s98
      %s113 = sphi 0, %s99
      %s117 = sphi 0, %s117
      %s119 = sphi 0, %s117
      %s120 = sphi 0, %s119
      %s134 = sphi 0, %s120
      %s138 = sphi 0, %s138
      %s140 = sphi 0, %s138
      %s141 = sphi 0, %s140
      %s155 = sphi 0, %s141
      %s159 = sphi 0, %s159
      %s161 = sphi 0, %s159
      %s162 = sphi 0, %s161
      %s176 = sphi 0, %s162
      %s180 = sphi 0, %s180
      %s182 = sphi 0, %s180
      %s183 = sphi 0, %s182
      %s197 = sphi 0, %s183
      %s201 = sphi 0, %s201
      %s203 = sphi 0, %s201
      %s204 = sphi 0, %s203
      %s218 = sphi 0, %s204
      %s224 = sphi 0, %s226
      %s227 = sphi 0, %s224
      %s228 = sphi 0, %s227
      %s244 = sphi 0, %s228
    $region4: #{tpu_custom_call.1} parent=1 // loop_header_branch
      %23 = sbr.rel (%p21) target = $region8
    $region5: #{tpu_custom_call.1} parent=1 // loop_body
      %s25 = ssub.s32 %s20, 1
      %s26 = ssub.s32 %s20, 2
      %s27 = sadd.s32 %s20, 1
      %s28 = ssub.s32 %s20, %s27
      %p29 = scmp.eq.s32.totalorder %s28, 0
      %s31 = sadd.s32 %s30, 1
      %s32 = scalar_select %p29, %s30, %s31
      %p35 = pneg %p29
      %p36 = scmp.eq.s32.totalorder %s20, 1
      %p37 = por %p35, %p36
      %p38 = scmp.ne.s32.totalorder %s30, %s33
      %p39 = scmp.eq.s32.totalorder %s20, 0
      %p40 = por %p38, %p39
      %p41 = scmp.ne.s32.totalorder %s30, %s33
      %p42 = scmp.eq.s32.totalorder %s25, 1
      %p43 = por %p41, %p42
      %p44 = scmp.ne.s32.totalorder %s33, %s34
      %p45 = scmp.eq.s32.totalorder %s25, 0
      %p46 = por %p44, %p45
      %p47 = scmp.ne.s32.totalorder %s33, %s34
      %p48 = scmp.eq.s32.totalorder %s26, 1
      %p49 = por %p47, %p48
      %p51 = scmp.ne.s32.totalorder %s34, %s50
      %p52 = scmp.eq.s32.totalorder %s26, 0
      %p53 = por %p51, %p52
      %s55 = sadd.s32 %s54, 1
      %p58 = scmp.eq.s32.totalorder %s20, 1
      %p59 = scmp.ne.s32.totalorder %s54, %s56
      %p60 = scmp.eq.s32.totalorder %s20, 0
      %p61 = por %p59, %p60
      %p62 = scmp.ne.s32.totalorder %s54, %s56
      %p63 = scmp.eq.s32.totalorder %s25, 1
      %p64 = por %p62, %p63
      %p65 = scmp.ne.s32.totalorder %s56, %s57
      %p66 = scmp.eq.s32.totalorder %s25, 0
      %p67 = por %p65, %p66
      %p68 = scmp.ne.s32.totalorder %s56, %s57
      %p69 = scmp.eq.s32.totalorder %s26, 1
      %p70 = por %p68, %p69
      %p72 = scmp.ne.s32.totalorder %s57, %s71
      %p73 = scmp.eq.s32.totalorder %s26, 0
      %p74 = por %p72, %p73
      %s76 = sadd.s32 %s75, 1
      %p79 = scmp.eq.s32.totalorder %s20, 1
      %p80 = scmp.ne.s32.totalorder %s75, %s77
      %p81 = scmp.eq.s32.totalorder %s20, 0
      %p82 = por %p80, %p81
      %p83 = scmp.ne.s32.totalorder %s75, %s77
      %p84 = scmp.eq.s32.totalorder %s25, 1
      %p85 = por %p83, %p84
      %p86 = scmp.ne.s32.totalorder %s77, %s78
      %p87 = scmp.eq.s32.totalorder %s25, 0
      %p88 = por %p86, %p87
      %p89 = scmp.ne.s32.totalorder %s77, %s78
      %p90 = scmp.eq.s32.totalorder %s26, 1
      %p91 = por %p89, %p90
      %p93 = scmp.ne.s32.totalorder %s78, %s92
      %p94 = scmp.eq.s32.totalorder %s26, 0
      %p95 = por %p93, %p94
      %s97 = sadd.s32 %s96, 1
      %p100 = scmp.eq.s32.totalorder %s20, 1
      %p101 = scmp.ne.s32.totalorder %s96, %s98
      %p102 = scmp.eq.s32.totalorder %s20, 0
      %p103 = por %p101, %p102
      %p104 = scmp.ne.s32.totalorder %s96, %s98
      %p105 = scmp.eq.s32.totalorder %s25, 1
      %p106 = por %p104, %p105
      %p107 = scmp.ne.s32.totalorder %s98, %s99
      %p108 = scmp.eq.s32.totalorder %s25, 0
      %p109 = por %p107, %p108
      %p110 = scmp.ne.s32.totalorder %s98, %s99
      %p111 = scmp.eq.s32.totalorder %s26, 1
      %p112 = por %p110, %p111
      %p114 = scmp.ne.s32.totalorder %s99, %s113
      %p115 = scmp.eq.s32.totalorder %s26, 0
      %p116 = por %p114, %p115
      %s118 = sadd.s32 %s117, 1
      %p121 = scmp.eq.s32.totalorder %s20, 1
      %p122 = scmp.ne.s32.totalorder %s117, %s119
      %p123 = scmp.eq.s32.totalorder %s20, 0
      %p124 = por %p122, %p123
      %p125 = scmp.ne.s32.totalorder %s117, %s119
      %p126 = scmp.eq.s32.totalorder %s25, 1
      %p127 = por %p125, %p126
      %p128 = scmp.ne.s32.totalorder %s119, %s120
      %p129 = scmp.eq.s32.totalorder %s25, 0
      %p130 = por %p128, %p129
      %p131 = scmp.ne.s32.totalorder %s119, %s120
      %p132 = scmp.eq.s32.totalorder %s26, 1
      %p133 = por %p131, %p132
      %p135 = scmp.ne.s32.totalorder %s120, %s134
      %p136 = scmp.eq.s32.totalorder %s26, 0
      %p137 = por %p135, %p136
      %s139 = sadd.s32 %s138, 1
      %p142 = scmp.eq.s32.totalorder %s20, 1
      %p143 = scmp.ne.s32.totalorder %s138, %s140
      %p144 = scmp.eq.s32.totalorder %s20, 0
      %p145 = por %p143, %p144
      %p146 = scmp.ne.s32.totalorder %s138, %s140
      %p147 = scmp.eq.s32.totalorder %s25, 1
      %p148 = por %p146, %p147
      %p149 = scmp.ne.s32.totalorder %s140, %s141
      %p150 = scmp.eq.s32.totalorder %s25, 0
      %p151 = por %p149, %p150
      %p152 = scmp.ne.s32.totalorder %s140, %s141
      %p153 = scmp.eq.s32.totalorder %s26, 1
      %p154 = por %p152, %p153
      %p156 = scmp.ne.s32.totalorder %s141, %s155
      %p157 = scmp.eq.s32.totalorder %s26, 0
      %p158 = por %p156, %p157
      %s160 = sadd.s32 %s159, 1
      %p163 = scmp.eq.s32.totalorder %s20, 1
      %p164 = scmp.ne.s32.totalorder %s159, %s161
      %p165 = scmp.eq.s32.totalorder %s20, 0
      %p166 = por %p164, %p165
      %p167 = scmp.ne.s32.totalorder %s159, %s161
      %p168 = scmp.eq.s32.totalorder %s25, 1
      %p169 = por %p167, %p168
      %p170 = scmp.ne.s32.totalorder %s161, %s162
      %p171 = scmp.eq.s32.totalorder %s25, 0
      %p172 = por %p170, %p171
      %p173 = scmp.ne.s32.totalorder %s161, %s162
      %p174 = scmp.eq.s32.totalorder %s26, 1
      %p175 = por %p173, %p174
      %p177 = scmp.ne.s32.totalorder %s162, %s176
      %p178 = scmp.eq.s32.totalorder %s26, 0
      %p179 = por %p177, %p178
      %s181 = sadd.s32 %s180, 1
      %p184 = scmp.eq.s32.totalorder %s20, 1
      %p185 = scmp.ne.s32.totalorder %s180, %s182
      %p186 = scmp.eq.s32.totalorder %s20, 0
      %p187 = por %p185, %p186
      %p188 = scmp.ne.s32.totalorder %s180, %s182
      %p189 = scmp.eq.s32.totalorder %s25, 1
      %p190 = por %p188, %p189
      %p191 = scmp.ne.s32.totalorder %s182, %s183
      %p192 = scmp.eq.s32.totalorder %s25, 0
      %p193 = por %p191, %p192
      %p194 = scmp.ne.s32.totalorder %s182, %s183
      %p195 = scmp.eq.s32.totalorder %s26, 1
      %p196 = por %p194, %p195
      %p198 = scmp.ne.s32.totalorder %s183, %s197
      %p199 = scmp.eq.s32.totalorder %s26, 0
      %p200 = por %p198, %p199
      %s202 = sadd.s32 %s201, 1
      %p205 = scmp.eq.s32.totalorder %s20, 1
      %p206 = scmp.ne.s32.totalorder %s201, %s203
      %p207 = scmp.eq.s32.totalorder %s20, 0
      %p208 = por %p206, %p207
      %p209 = scmp.ne.s32.totalorder %s201, %s203
      %p210 = scmp.eq.s32.totalorder %s25, 1
      %p211 = por %p209, %p210
      %p212 = scmp.ne.s32.totalorder %s203, %s204
      %p213 = scmp.eq.s32.totalorder %s25, 0
      %p214 = por %p212, %p213
      %p215 = scmp.ne.s32.totalorder %s203, %s204
      %p216 = scmp.eq.s32.totalorder %s26, 1
      %p217 = por %p215, %p216
      %p219 = scmp.ne.s32.totalorder %s204, %s218
      %p220 = scmp.eq.s32.totalorder %s26, 0
      %p221 = por %p219, %p220
      %s222 = ssub.s32 %s20, %s27
      %p223 = scmp.eq.s32.totalorder %s222, 0
      %s225 = sadd.s32 %s224, 1
      %s226 = scalar_select %p223, %s224, %s225
      %p229 = pneg %p223
      %p230 = scmp.eq.s32.totalorder %s20, 1
      %p231 = por %p229, %p230
      %p232 = scmp.ne.s32.totalorder %s224, %s227
      %p233 = scmp.eq.s32.totalorder %s20, 0
      %p234 = por %p232, %p233
      %p235 = scmp.ne.s32.totalorder %s224, %s227
      %p236 = scmp.eq.s32.totalorder %s25, 1
      %p237 = por %p235, %p236
      %p238 = scmp.ne.s32.totalorder %s227, %s228
      %p239 = scmp.eq.s32.totalorder %s25, 0
      %p240 = por %p238, %p239
      %p241 = scmp.ne.s32.totalorder %s227, %s228
      %p242 = scmp.eq.s32.totalorder %s26, 1
      %p243 = por %p241, %p242
      %p245 = scmp.ne.s32.totalorder %s228, %s244
      %p246 = scmp.eq.s32.totalorder %s26, 0
      %p247 = por %p245, %p246
      %p248 = scmp.le.s32.totalorder 1, %s20
      %p249 = scmp.lt.s32.totalorder %s20, 3
      %p250 = pnand %p248, %p249
      %p251 = pneg %p250
      // Predicated region
      $region9: #{tpu_custom_call.1} parent=5 // pred_check
        _
      $region10: #{tpu_custom_call.1} parent=5 // pred_check_branch
        %253 = sbr.rel (%p250) target = $region12
      $region11: #{tpu_custom_call.1} parent=5 // pred_region
        %s254 = ssub.s32 %s20, 1
        // Predicated region
        $region13: #{tpu_custom_call.1} parent=11 // pred_check
          %p255 = pneg %p67
        $region14: #{tpu_custom_call.1} parent=11 // pred_check_branch
          %257 = sbr.rel (%p255) target = $region16
        $region15: #{tpu_custom_call.1} parent=11 // pred_region
          _
        $region16: #{tpu_custom_call.1} parent=11 // pred_fallthru
          _
        // Predicated region
        $region17: #{tpu_custom_call.1} parent=11 // pred_check
          %p258 = pneg %p88
        $region18: #{tpu_custom_call.1} parent=11 // pred_check_branch
          %260 = sbr.rel (%p258) target = $region20
        $region19: #{tpu_custom_call.1} parent=11 // pred_region
          _
        $region20: #{tpu_custom_call.1} parent=11 // pred_fallthru
          _
        // Predicated region
        $region21: #{tpu_custom_call.1} parent=11 // pred_check
          %p261 = pneg %p109
        $region22: #{tpu_custom_call.1} parent=11 // pred_check_branch
          %263 = sbr.rel (%p261) target = $region24
        $region23: #{tpu_custom_call.1} parent=11 // pred_region
          _
        $region24: #{tpu_custom_call.1} parent=11 // pred_fallthru
          _
        // Predicated region
        $region25: #{tpu_custom_call.1} parent=11 // pred_check
          %p264 = pneg %p130
        $region26: #{tpu_custom_call.1} parent=11 // pred_check_branch
          %266 = sbr.rel (%p264) target = $region28
        $region27: #{tpu_custom_call.1} parent=11 // pred_region
          _
        $region28: #{tpu_custom_call.1} parent=11 // pred_fallthru
          _
        // Predicated region
        $region29: #{tpu_custom_call.1} parent=11 // pred_check
          %p267 = pneg %p151
        $region30: #{tpu_custom_call.1} parent=11 // pred_check_branch
          %269 = sbr.rel (%p267) target = $region32
        $region31: #{tpu_custom_call.1} parent=11 // pred_region
          _
        $region32: #{tpu_custom_call.1} parent=11 // pred_fallthru
          _
        // Predicated region
        $region33: #{tpu_custom_call.1} parent=11 // pred_check
          %p270 = pneg %p172
        $region34: #{tpu_custom_call.1} parent=11 // pred_check_branch
          %272 = sbr.rel (%p270) target = $region36
        $region35: #{tpu_custom_call.1} parent=11 // pred_region
          _
        $region36: #{tpu_custom_call.1} parent=11 // pred_fallthru
          _
        // Predicated region
        $region37: #{tpu_custom_call.1} parent=11 // pred_check
          %p273 = pneg %p193
        $region38: #{tpu_custom_call.1} parent=11 // pred_check_branch
          %275 = sbr.rel (%p273) target = $region40
        $region39: #{tpu_custom_call.1} parent=11 // pred_region
          _
        $region40: #{tpu_custom_call.1} parent=11 // pred_fallthru
          _
        // Predicated region
        $region41: #{tpu_custom_call.1} parent=11 // pred_check
          %p276 = pneg %p214
        $region42: #{tpu_custom_call.1} parent=11 // pred_check_branch
          %278 = sbr.rel (%p276) target = $region44
        $region43: #{tpu_custom_call.1} parent=11 // pred_region
          _
        $region44: #{tpu_custom_call.1} parent=11 // pred_fallthru
          _
      $region12: #{tpu_custom_call.1} parent=5 // pred_fallthru
        _
      %p279 = scmp.lt.s32.totalorder %s20, 2
      // Predicated region
      $region45: #{tpu_custom_call.1} parent=5 // pred_check
        %p280 = pneg %p279
      $region46: #{tpu_custom_call.1} parent=5 // pred_check_branch
        %282 = sbr.rel (%p280) target = $region48
      $region47: #{tpu_custom_call.1} parent=5 // pred_region
        // Predicated region
        $region49: #{tpu_custom_call.1} parent=47 // pred_check
          %p283 = pneg %p40
        $region50: #{tpu_custom_call.1} parent=47 // pred_check_branch
          %285 = sbr.rel (%p283) target = $region52
        $region51: #{tpu_custom_call.1} parent=47 // pred_region
          %s286 = smul.u32 16, %s20
          %p287 = scmp.lt.s32.totalorder %s286, 31
          %s288 = scalar_select %p287, %s286, 31
          %s289 = smul.addr %s288, 8
          %s290 = scalar_lea.vmem %s0, %s289
          %s291 = smul.u32 16, %s20
        $region52: #{tpu_custom_call.1} parent=47 // pred_fallthru
          _
      $region48: #{tpu_custom_call.1} parent=5 // pred_fallthru
        _
      %p292 = scmp.le.s32.totalorder 1, %s20
      %p293 = scmp.lt.s32.totalorder %s20, 3
      %p294 = pnand %p292, %p293
      %p295 = pneg %p294
      // Predicated region
      $region53: #{tpu_custom_call.1} parent=5 // pred_check
        _
      $region54: #{tpu_custom_call.1} parent=5 // pred_check_branch
        %297 = sbr.rel (%p294) target = $region56
      $region55: #{tpu_custom_call.1} parent=5 // pred_region
        %s298 = ssub.s32 %s20, 1
        %s299 = smul.u32 16, %s25
        %p300 = scmp.lt.s32.totalorder %s299, 31
        %s301 = scalar_select %p300, %s299, 31
        %s302 = smul.addr %s301, 8
        %s303 = scalar_lea.vmem %s0, %s302
        %p304 = pneg %p46
        %p305 = pneg %p43
        %p306 = pneg %p67
        %p307 = pneg %p64
        %p308 = pneg %p88
        %p309 = pneg %p85
        %p310 = pneg %p109
        %p311 = pneg %p106
        %p312 = pneg %p130
        %p313 = pneg %p127
        %p314 = pneg %p151
        %p315 = pneg %p148
        %p316 = pneg %p172
        %p317 = pneg %p169
        %p318 = pneg %p193
        %p319 = pneg %p190
        %p320 = pneg %p214
        %p321 = pneg %p211
        %p322 = pneg %p240
        %p323 = pneg %p237
        %s324 = sand.u32 %s227, 1
        %s325 = scalar_lea.sflag [#allocation4], %s324
        %s326 = sand.u32 %s227, 1
        %s327 = scalar_lea.vmem [#allocation3], %s326
        %s328 = smul.u32 16, %s25
        %p329 = scmp.lt.s32.totalorder %s328, 31
        %s330 = scalar_select %p329, %s328, 31
        %s331 = smul.addr %s330, 8
        %s332 = scalar_lea.vmem %s0, %s331
        %s333 = smul.u32 16, %s25
        %v334 = vld [vmem:[%s332] sm:$0xff]
        %v335 = vld [vmem:[%s332 + $0x8] sm:$0xff]
        %v336 = vld [vmem:[%s332 + $0x10] sm:$0xff]
        %v337 = vld [vmem:[%s332 + $0x18] sm:$0xff]
        %v338 = vld [vmem:[%s332 + $0x20] sm:$0xff]
        %v339 = vld [vmem:[%s332 + $0x28] sm:$0xff]
        %v340 = vld [vmem:[%s332 + $0x30] sm:$0xff]
        %v341 = vld [vmem:[%s332 + $0x38] sm:$0xff]
        %v342 = vld [vmem:[%s332 + $0x40] sm:$0xff]
        %v343 = vld [vmem:[%s332 + $0x48] sm:$0xff]
        %v344 = vld [vmem:[%s332 + $0x50] sm:$0xff]
        %v345 = vld [vmem:[%s332 + $0x58] sm:$0xff]
        %v346 = vld [vmem:[%s332 + $0x60] sm:$0xff]
        %v347 = vld [vmem:[%s332 + $0x68] sm:$0xff]
        %v348 = vld [vmem:[%s332 + $0x70] sm:$0xff]
        %v349 = vld [vmem:[%s332 + $0x78] sm:$0xff]
        %v350 = vld [vmem:[%s1] sm:$0xff]
        %v351 = vld [vmem:[%s1 + $0x8] sm:$0x1f]
        %v352 = vld [vmem:[%s2] sm:$0x1]
        %v354 = vlaneseq
        %v355 = vshrl.u32 %v354, 7
        %v356 = vsub.s32 0, %v355
        %v357 = vrot.slane %v352, %v356
        %vm359 = vcmask 105472
        %v361 = vsel %vm359, %v334, 0
        %v364 = vsel %vm359, %v335, 0
        %v367 = vsel %vm359, %v336, 0
        %v370 = vsel %vm359, %v337, 0
        %v373 = vsel %vm359, %v338, 0
        %v376 = vsel %vm359, %v339, 0
        %v379 = vsel %vm359, %v340, 0
        %v382 = vsel %vm359, %v341, 0
        %v385 = vsel %vm359, %v342, 0
        %v388 = vsel %vm359, %v343, 0
        %v391 = vsel %vm359, %v344, 0
        %v394 = vsel %vm359, %v345, 0
        %v397 = vsel %vm359, %v346, 0
        %v400 = vsel %vm359, %v347, 0
        %v403 = vsel %vm359, %v348, 0
        %v406 = vsel %vm359, %v349, 0
        %vm408 = vcmask 1044480
        %v410 = vsel %vm408, %v351, 0
        %412 = vmatprep.subr.mxu0 0.0
        %413 = vmatpush1.msra.mxu0 %v350
        %414 = vmatprep.subr.mxu0 0.0
        %415 = vmatpush1.msra.mxu0 %v410
        %416 = vmatprep.subr.mxu0 0.0
        %417 = vmatpush1.msra.mxu0 0.0
        %418 = vmatprep.subr.mxu0 0.0
        %419 = vmatpush1.msra.mxu0 0.0
        %420 = vmatprep.subr.mxu0 0.0
        %421 = vmatpush1.msra.mxu0 0.0
        %422 = vmatprep.subr.mxu0 0.0
        %423 = vmatpush1.msra.mxu0 0.0
        %424 = vmatprep.subr.mxu0 0.0
        %425 = vmatpush1.msra.mxu0 0.0
        %426 = vmatprep.subr.mxu0 0.0
        %427 = vmatpush1.msra.mxu0 0.0
        %428 = vmatprep.subr.mxu0 0.0
        %429 = vmatpush1.msra.mxu0 0.0
        %430 = vmatprep.subr.mxu0 0.0
        %431 = vmatpush1.msra.mxu0 0.0
        %432 = vmatprep.subr.mxu0 0.0
        %433 = vmatpush1.msra.mxu0 0.0
        %434 = vmatprep.subr.mxu0 0.0
        %435 = vmatpush1.msra.mxu0 0.0
        %436 = vmatprep.subr.mxu0 0.0
        %437 = vmatpush1.msra.mxu0 0.0
        %438 = vmatprep.subr.mxu0 0.0
        %439 = vmatpush1.msra.mxu0 0.0
        %440 = vmatprep.subr.mxu0 0.0
        %441 = vmatpush1.msra.mxu0 0.0
        %442 = vmatprep.subr.mxu0 0.0
        %443 = vmatpush1.msra.mxu0 0.0
        %444 = vmatprep.subr.mxu0 0.0
        %445 = vmatpush1.msra.mxu0 0.0
        %446 = vmatprep.subr.mxu0 0.0
        %447 = vmatpush1.msra.mxu0 0.0
        %448 = vmatprep.subr.mxu0 0.0
        %449 = vmatpush1.msra.mxu0 0.0
        %450 = vmatprep.subr.mxu0 0.0
        %451 = vmatpush1.msra.mxu0 0.0
        %452 = vmatprep.subr.mxu0 0.0
        %453 = vmatpush1.msra.mxu0 0.0
        %454 = vmatprep.subr.mxu0 0.0
        %455 = vmatpush1.msra.mxu0 0.0
        %456 = vmatprep.subr.mxu0 0.0
        %457 = vmatpush1.msra.mxu0 0.0
        %458 = vmatprep.subr.mxu0 0.0
        %459 = vmatpush1.msra.mxu0 0.0
        %460 = vmatprep.subr.mxu0 0.0
        %461 = vmatpush1.msra.mxu0 0.0
        %462 = vmatprep.subr.mxu0 0.0
        %463 = vmatpush1.msra.mxu0 0.0
        %464 = vmatprep.subr.mxu0 0.0
        %465 = vmatpush1.msra.mxu0 0.0
        %466 = vmatprep.subr.mxu0 0.0
        %467 = vmatpush1.msra.mxu0 0.0
        %468 = vmatprep.subr.mxu0 0.0
        %469 = vmatpush1.msra.mxu0 0.0
        %470 = vmatprep.subr.mxu0 0.0
        %471 = vmatpush1.msra.mxu0 0.0
        %472 = vmatprep.subr.mxu0 0.0
        %473 = vmatpush1.msra.mxu0 0.0
        %474 = vmatprep.subr.mxu0 0.0
        %475 = vmatpush1.msra.mxu0 0.0
        %476 = vmatprep.mubr.f32.mxu0 0.0
        %477 = vmatmul.mubr.f32.gmra.mrb[0].mxu0 %v361
        %v478 = vpop.f32.mrb[0].mxu0
        %v479 = vadd.f32 %v357, %v478
        %v480 = vpop.f32.mrb[0].mxu0
        %481 = vmatprep.mubr.f32.mxu0 0.0
        %482 = vmatmul.mubr.f32.gmra.mrb[0].mxu0 %v364
        %v483 = vpop.f32.mrb[0].mxu0
        %v484 = vadd.f32 %v357, %v483
        %v485 = vpop.f32.mrb[0].mxu0
        %486 = vmatprep.mubr.f32.mxu0 0.0
        %487 = vmatmul.mubr.f32.gmra.mrb[0].mxu0 %v367
        %v488 = vpop.f32.mrb[0].mxu0
        %v489 = vadd.f32 %v357, %v488
        %v490 = vpop.f32.mrb[0].mxu0
        %491 = vmatprep.mubr.f32.mxu0 0.0
        %492 = vmatmul.mubr.f32.gmra.mrb[0].mxu0 %v370
        %v493 = vpop.f32.mrb[0].mxu0
        %v494 = vadd.f32 %v357, %v493
        %v495 = vpop.f32.mrb[0].mxu0
        %496 = vmatprep.mubr.f32.mxu0 0.0
        %497 = vmatmul.mubr.f32.gmra.mrb[0].mxu0 %v373
        %v498 = vpop.f32.mrb[0].mxu0
        %v499 = vadd.f32 %v357, %v498
        %v500 = vpop.f32.mrb[0].mxu0
        %501 = vmatprep.mubr.f32.mxu0 0.0
        %502 = vmatmul.mubr.f32.gmra.mrb[0].mxu0 %v376
        %v503 = vpop.f32.mrb[0].mxu0
        %v504 = vadd.f32 %v357, %v503
        %v505 = vpop.f32.mrb[0].mxu0
        %506 = vmatprep.mubr.f32.mxu0 0.0
        %507 = vmatmul.mubr.f32.gmra.mrb[0].mxu0 %v379
        %v508 = vpop.f32.mrb[0].mxu0
        %v509 = vadd.f32 %v357, %v508
        %v510 = vpop.f32.mrb[0].mxu0
        %511 = vmatprep.mubr.f32.mxu0 0.0
        %512 = vmatmul.mubr.f32.gmra.mrb[0].mxu0 %v382
        %v513 = vpop.f32.mrb[0].mxu0
        %v514 = vadd.f32 %v357, %v513
        %v515 = vpop.f32.mrb[0].mxu0
        %516 = vmatprep.mubr.f32.mxu0 0.0
        %517 = vmatmul.mubr.f32.gmra.mrb[0].mxu0 %v385
        %v518 = vpop.f32.mrb[0].mxu0
        %v519 = vadd.f32 %v357, %v518
        %v520 = vpop.f32.mrb[0].mxu0
        %521 = vmatprep.mubr.f32.mxu0 0.0
        %522 = vmatmul.mubr.f32.gmra.mrb[0].mxu0 %v388
        %v523 = vpop.f32.mrb[0].mxu0
        %v524 = vadd.f32 %v357, %v523
        %v525 = vpop.f32.mrb[0].mxu0
        %526 = vmatprep.mubr.f32.mxu0 0.0
        %527 = vmatmul.mubr.f32.gmra.mrb[0].mxu0 %v391
        %v528 = vpop.f32.mrb[0].mxu0
        %v529 = vadd.f32 %v357, %v528
        %v530 = vpop.f32.mrb[0].mxu0
        %531 = vmatprep.mubr.f32.mxu0 0.0
        %532 = vmatmul.mubr.f32.gmra.mrb[0].mxu0 %v394
        %v533 = vpop.f32.mrb[0].mxu0
        %v534 = vadd.f32 %v357, %v533
        %v535 = vpop.f32.mrb[0].mxu0
        %536 = vmatprep.mubr.f32.mxu0 0.0
        %537 = vmatmul.mubr.f32.gmra.mrb[0].mxu0 %v397
        %v538 = vpop.f32.mrb[0].mxu0
        %v539 = vadd.f32 %v357, %v538
        %v540 = vpop.f32.mrb[0].mxu0
        %541 = vmatprep.mubr.f32.mxu0 0.0
        %542 = vmatmul.mubr.f32.gmra.mrb[0].mxu0 %v400
        %v543 = vpop.f32.mrb[0].mxu0
        %v544 = vadd.f32 %v357, %v543
        %v545 = vpop.f32.mrb[0].mxu0
        %546 = vmatprep.mubr.f32.mxu0 0.0
        %547 = vmatmul.mubr.f32.gmra.mrb[0].mxu0 %v403
        %v548 = vpop.f32.mrb[0].mxu0
        %v549 = vadd.f32 %v357, %v548
        %v550 = vpop.f32.mrb[0].mxu0
        %551 = vmatprep.mubr.f32.mxu0 0.0
        %552 = vmatmul.mubr.f32.gmra.mrb[0].mxu0 %v406
        %v553 = vpop.f32.mrb[0].mxu0
        %v554 = vadd.f32 %v357, %v553
        %v555 = vpop.f32.mrb[0].mxu0
        %556 = vdwg.mxu0
        %v557 = vmax.f32 %v479, 0.0
        %v558 = vmax.f32 %v484, 0.0
        %v559 = vmax.f32 %v489, 0.0
        %v560 = vmax.f32 %v494, 0.0
        %v561 = vmax.f32 %v499, 0.0
        %v562 = vmax.f32 %v504, 0.0
        %v563 = vmax.f32 %v509, 0.0
        %v564 = vmax.f32 %v514, 0.0
        %v565 = vmax.f32 %v519, 0.0
        %v566 = vmax.f32 %v524, 0.0
        %v567 = vmax.f32 %v529, 0.0
        %v568 = vmax.f32 %v534, 0.0
        %v569 = vmax.f32 %v539, 0.0
        %v570 = vmax.f32 %v544, 0.0
        %v571 = vmax.f32 %v549, 0.0
        %v572 = vmax.f32 %v554, 0.0
        %v573 = vld [vmem:[%s3] sm:$0xff]
        %v574 = vld [vmem:[%s3 + $0x8] sm:$0xff]
        %v575 = vld [vmem:[%s3 + $0x10] sm:$0xff]
        %v576 = vld [vmem:[%s3 + $0x18] sm:$0xff]
        %v577 = vld [vmem:[%s3 + $0x20] sm:$0xff]
        %v578 = vld [vmem:[%s3 + $0x28] sm:$0xff]
        %v579 = vld [vmem:[%s3 + $0x30] sm:$0xff]
        %v580 = vld [vmem:[%s3 + $0x38] sm:$0xff]
        %v581 = vld [vmem:[%s4] sm:$0xff]
        %v582 = vld [vmem:[%s4 + $0x8] sm:$0xff]
        %v583 = vld [vmem:[%s4 + $0x10] sm:$0xff]
        %v584 = vld [vmem:[%s4 + $0x18] sm:$0xff]
        %v585 = vld [vmem:[%s4 + $0x20] sm:$0xff]
        %v586 = vld [vmem:[%s4 + $0x28] sm:$0xff]
        %v587 = vld [vmem:[%s4 + $0x30] sm:$0xff]
        %v588 = vld [vmem:[%s4 + $0x38] sm:$0xff]
        %590 = vset.pattern.permute.xlu0 0
        %591 = vperm.xlu0 %590, %v581
        %v592 = vpop.permute.xlu0 %591
        %595 = vset.pattern.permute.xlu0 0
        %596 = vperm.xlu0 %595, %v582
        %v597 = vpop.permute.xlu0 %596
        %600 = vset.pattern.permute.xlu0 0
        %601 = vperm.xlu0 %600, %v583
        %v602 = vpop.permute.xlu0 %601
        %605 = vset.pattern.permute.xlu0 0
        %606 = vperm.xlu0 %605, %v584
        %v607 = vpop.permute.xlu0 %606
        %610 = vset.pattern.permute.xlu0 0
        %611 = vperm.xlu0 %610, %v585
        %v612 = vpop.permute.xlu0 %611
        %615 = vset.pattern.permute.xlu0 0
        %616 = vperm.xlu0 %615, %v586
        %v617 = vpop.permute.xlu0 %616
        %620 = vset.pattern.permute.xlu0 0
        %621 = vperm.xlu0 %620, %v587
        %v622 = vpop.permute.xlu0 %621
        %625 = vset.pattern.permute.xlu0 0
        %626 = vperm.xlu0 %625, %v588
        %v627 = vpop.permute.xlu0 %626
        %629 = vmatprep.subr.mxu0 0.0
        %630 = vmatpush1.xpose.msra.mxu0 %v557
        %631 = vmatprep.subr.mxu0 0.0
        %632 = vmatpush1.xpose.msra.mxu0 %v558
        %633 = vmatprep.subr.mxu0 0.0
        %634 = vmatpush1.xpose.msra.mxu0 %v559
        %635 = vmatprep.subr.mxu0 0.0
        %636 = vmatpush1.xpose.msra.mxu0 %v560
        %637 = vmatprep.subr.mxu0 0.0
        %638 = vmatpush1.xpose.msra.mxu0 %v561
        %639 = vmatprep.subr.mxu0 0.0
        %640 = vmatpush1.xpose.msra.mxu0 %v562
        %641 = vmatprep.subr.mxu0 0.0
        %642 = vmatpush1.xpose.msra.mxu0 %v563
        %643 = vmatprep.subr.mxu0 0.0
        %644 = vmatpush1.xpose.msra.mxu0 %v564
        %645 = vmatprep.subr.mxu0 0.0
        %646 = vmatpush1.xpose.msra.mxu0 %v565
        %647 = vmatprep.subr.mxu0 0.0
        %648 = vmatpush1.xpose.msra.mxu0 %v566
        %649 = vmatprep.subr.mxu0 0.0
        %650 = vmatpush1.xpose.msra.mxu0 %v567
        %651 = vmatprep.subr.mxu0 0.0
        %652 = vmatpush1.xpose.msra.mxu0 %v568
        %653 = vmatprep.subr.mxu0 0.0
        %654 = vmatpush1.xpose.msra.mxu0 %v569
        %655 = vmatprep.subr.mxu0 0.0
        %656 = vmatpush1.xpose.msra.mxu0 %v570
        %657 = vmatprep.subr.mxu0 0.0
        %658 = vmatpush1.xpose.msra.mxu0 %v571
        %659 = vmatprep.subr.mxu0 0.0
        %660 = vmatpush1.xpose.msra.mxu0 %v572
        %661 = vmatprep.subr.mxu0 0.0
        %662 = vmatpush1.xpose.msra.mxu0 0.0
        %663 = vmatprep.subr.mxu0 0.0
        %664 = vmatpush1.xpose.msra.mxu0 0.0
        %665 = vmatprep.subr.mxu0 0.0
        %666 = vmatpush1.xpose.msra.mxu0 0.0
        %667 = vmatprep.subr.mxu0 0.0
        %668 = vmatpush1.xpose.msra.mxu0 0.0
        %669 = vmatprep.subr.mxu0 0.0
        %670 = vmatpush1.xpose.msra.mxu0 0.0
        %671 = vmatprep.subr.mxu0 0.0
        %672 = vmatpush1.xpose.msra.mxu0 0.0
        %673 = vmatprep.subr.mxu0 0.0
        %674 = vmatpush1.xpose.msra.mxu0 0.0
        %675 = vmatprep.subr.mxu0 0.0
        %676 = vmatpush1.xpose.msra.mxu0 0.0
        %677 = vmatprep.subr.mxu0 0.0
        %678 = vmatpush1.xpose.msra.mxu0 0.0
        %679 = vmatprep.subr.mxu0 0.0
        %680 = vmatpush1.xpose.msra.mxu0 0.0
        %681 = vmatprep.subr.mxu0 0.0
        %682 = vmatpush1.xpose.msra.mxu0 0.0
        %683 = vmatprep.subr.mxu0 0.0
        %684 = vmatpush1.xpose.msra.mxu0 0.0
        %685 = vmatprep.subr.mxu0 0.0
        %686 = vmatpush1.xpose.msra.mxu0 0.0
        %687 = vmatprep.subr.mxu0 0.0
        %688 = vmatpush1.xpose.msra.mxu0 0.0
        %689 = vmatprep.subr.mxu0 0.0
        %690 = vmatpush1.xpose.msra.mxu0 0.0
        %691 = vmatprep.subr.mxu0 0.0
        %692 = vmatpush1.xpose.msra.mxu0 0.0
        %693 = vmatprep.mubr.f32.mxu0 0.0
        %694 = vmatmul.mubr.f32.gmra.mrb[0].mxu0 %v573
        %v695 = vpop.f32.mrb[0].mxu0
        %v696 = vadd.f32 %v592, %v695
        %v697 = vpop.f32.mrb[0].mxu0
        %698 = vmatprep.mubr.f32.mxu0 0.0
        %699 = vmatmul.mubr.f32.gmra.mrb[0].mxu0 %v574
        %v700 = vpop.f32.mrb[0].mxu0
        %v701 = vadd.f32 %v597, %v700
        %v702 = vpop.f32.mrb[0].mxu0
        %703 = vmatprep.mubr.f32.mxu0 0.0
        %704 = vmatmul.mubr.f32.gmra.mrb[0].mxu0 %v575
        %v705 = vpop.f32.mrb[0].mxu0
        %v706 = vadd.f32 %v602, %v705
        %v707 = vpop.f32.mrb[0].mxu0
        %708 = vmatprep.mubr.f32.mxu0 0.0
        %709 = vmatmul.mubr.f32.gmra.mrb[0].mxu0 %v576
        %v710 = vpop.f32.mrb[0].mxu0
        %v711 = vadd.f32 %v607, %v710
        %v712 = vpop.f32.mrb[0].mxu0
        %713 = vmatprep.mubr.f32.mxu0 0.0
        %714 = vmatmul.mubr.f32.gmra.mrb[0].mxu0 %v577
        %v715 = vpop.f32.mrb[0].mxu0
        %v716 = vadd.f32 %v612, %v715
        %v717 = vpop.f32.mrb[0].mxu0
        %718 = vmatprep.mubr.f32.mxu0 0.0
        %719 = vmatmul.mubr.f32.gmra.mrb[0].mxu0 %v578
        %v720 = vpop.f32.mrb[0].mxu0
        %v721 = vadd.f32 %v617, %v720
        %v722 = vpop.f32.mrb[0].mxu0
        %723 = vmatprep.mubr.f32.mxu0 0.0
        %724 = vmatmul.mubr.f32.gmra.mrb[0].mxu0 %v579
        %v725 = vpop.f32.mrb[0].mxu0
        %v726 = vadd.f32 %v622, %v725
        %v727 = vpop.f32.mrb[0].mxu0
        %728 = vmatprep.mubr.f32.mxu0 0.0
        %729 = vmatmul.mubr.f32.gmra.mrb[0].mxu0 %v580
        %v730 = vpop.f32.mrb[0].mxu0
        %v731 = vadd.f32 %v627, %v730
        %v732 = vpop.f32.mrb[0].mxu0
        %733 = vdwg.mxu0
        %v734 = vmax.f32 %v696, 0.0
        %v735 = vmax.f32 %v701, 0.0
        %v736 = vmax.f32 %v706, 0.0
        %v737 = vmax.f32 %v711, 0.0
        %v738 = vmax.f32 %v716, 0.0
        %v739 = vmax.f32 %v721, 0.0
        %v740 = vmax.f32 %v726, 0.0
        %v741 = vmax.f32 %v731, 0.0
        %v742 = vld [vmem:[%s5] sm:$0xff]
        %v743 = vld [vmem:[%s5 + $0x8] sm:$0xff]
        %v744 = vld [vmem:[%s5 + $0x10] sm:$0xff]
        %v745 = vld [vmem:[%s5 + $0x18] sm:$0xff]
        %v746 = vld [vmem:[%s6] sm:$0xff]
        %v747 = vld [vmem:[%s6 + $0x8] sm:$0xff]
        %v748 = vld [vmem:[%s6 + $0x10] sm:$0xff]
        %v749 = vld [vmem:[%s6 + $0x18] sm:$0xff]
        %751 = vset.pattern.permute.xlu0 0
        %752 = vperm.xlu0 %751, %v746
        %v753 = vpop.permute.xlu0 %752
        %756 = vset.pattern.permute.xlu0 0
        %757 = vperm.xlu0 %756, %v747
        %v758 = vpop.permute.xlu0 %757
        %761 = vset.pattern.permute.xlu0 0
        %762 = vperm.xlu0 %761, %v748
        %v763 = vpop.permute.xlu0 %762
        %766 = vset.pattern.permute.xlu0 0
        %767 = vperm.xlu0 %766, %v749
        %v768 = vpop.permute.xlu0 %767
        %vm770 = vcmask 523264
        %v772 = vsel %vm770, %v742, 0
        %v775 = vsel %vm770, %v743, 0
        %v778 = vsel %vm770, %v744, 0
        %v781 = vsel %vm770, %v745, 0
        %783 = vmatprep.subr.mxu0 0.0
        %784 = vmatpush1.msra.mxu0 %v734
        %785 = vmatprep.subr.mxu0 0.0
        %786 = vmatpush1.msra.mxu0 %v735
        %787 = vmatprep.subr.mxu0 0.0
        %788 = vmatpush1.msra.mxu0 %v736
        %789 = vmatprep.subr.mxu0 0.0
        %790 = vmatpush1.msra.mxu0 %v737
        %791 = vmatprep.subr.mxu0 0.0
        %792 = vmatpush1.msra.mxu0 %v738
        %793 = vmatprep.subr.mxu0 0.0
        %794 = vmatpush1.msra.mxu0 %v739
        %795 = vmatprep.subr.mxu0 0.0
        %796 = vmatpush1.msra.mxu0 %v740
        %797 = vmatprep.subr.mxu0 0.0
        %798 = vmatpush1.msra.mxu0 %v741
        %799 = vmatprep.subr.mxu0 0.0
        %800 = vmatpush1.msra.mxu0 0.0
        %801 = vmatprep.subr.mxu0 0.0
        %802 = vmatpush1.msra.mxu0 0.0
        %803 = vmatprep.subr.mxu0 0.0
        %804 = vmatpush1.msra.mxu0 0.0
        %805 = vmatprep.subr.mxu0 0.0
        %806 = vmatpush1.msra.mxu0 0.0
        %807 = vmatprep.subr.mxu0 0.0
        %808 = vmatpush1.msra.mxu0 0.0
        %809 = vmatprep.subr.mxu0 0.0
        %810 = vmatpush1.msra.mxu0 0.0
        %811 = vmatprep.subr.mxu0 0.0
        %812 = vmatpush1.msra.mxu0 0.0
        %813 = vmatprep.subr.mxu0 0.0
        %814 = vmatpush1.msra.mxu0 0.0
        %815 = vmatprep.subr.mxu0 0.0
        %816 = vmatpush1.msra.mxu0 0.0
        %817 = vmatprep.subr.mxu0 0.0
        %818 = vmatpush1.msra.mxu0 0.0
        %819 = vmatprep.subr.mxu0 0.0
        %820 = vmatpush1.msra.mxu0 0.0
        %821 = vmatprep.subr.mxu0 0.0
        %822 = vmatpush1.msra.mxu0 0.0
        %823 = vmatprep.subr.mxu0 0.0
        %824 = vmatpush1.msra.mxu0 0.0
        %825 = vmatprep.subr.mxu0 0.0
        %826 = vmatpush1.msra.mxu0 0.0
        %827 = vmatprep.subr.mxu0 0.0
        %828 = vmatpush1.msra.mxu0 0.0
        %829 = vmatprep.subr.mxu0 0.0
        %830 = vmatpush1.msra.mxu0 0.0
        %831 = vmatprep.subr.mxu0 0.0
        %832 = vmatpush1.msra.mxu0 0.0
        %833 = vmatprep.subr.mxu0 0.0
        %834 = vmatpush1.msra.mxu0 0.0
        %835 = vmatprep.subr.mxu0 0.0
        %836 = vmatpush1.msra.mxu0 0.0
        %837 = vmatprep.subr.mxu0 0.0
        %838 = vmatpush1.msra.mxu0 0.0
        %839 = vmatprep.subr.mxu0 0.0
        %840 = vmatpush1.msra.mxu0 0.0
        %841 = vmatprep.subr.mxu0 0.0
        %842 = vmatpush1.msra.mxu0 0.0
        %843 = vmatprep.subr.mxu0 0.0
        %844 = vmatpush1.msra.mxu0 0.0
        %845 = vmatprep.subr.mxu0 0.0
        %846 = vmatpush1.msra.mxu0 0.0
        %847 = vmatprep.mubr.f32.mxu0 0.0
        %848 = vmatmul.mubr.f32.gmra.mrb[0].mxu0 %v772
        %v849 = vpop.f32.mrb[0].mxu0
        %v850 = vadd.f32 %v753, %v849
        %v851 = vpop.f32.mrb[0].mxu0
        %852 = vmatprep.mubr.f32.mxu0 0.0
        %853 = vmatmul.mubr.f32.gmra.mrb[0].mxu0 %v775
        %v854 = vpop.f32.mrb[0].mxu0
        %v855 = vadd.f32 %v758, %v854
        %v856 = vpop.f32.mrb[0].mxu0
        %857 = vmatprep.mubr.f32.mxu0 0.0
        %858 = vmatmul.mubr.f32.gmra.mrb[0].mxu0 %v778
        %v859 = vpop.f32.mrb[0].mxu0
        %v860 = vadd.f32 %v763, %v859
        %v861 = vpop.f32.mrb[0].mxu0
        %862 = vmatprep.mubr.f32.mxu0 0.0
        %863 = vmatmul.mubr.f32.gmra.mrb[0].mxu0 %v781
        %v864 = vpop.f32.mrb[0].mxu0
        %v865 = vadd.f32 %v768, %v864
        %v866 = vpop.f32.mrb[0].mxu0
        %867 = vdwg.mxu0
        %v868 = vmax.f32 %v850, 0.0
        %v869 = vmax.f32 %v855, 0.0
        %v870 = vmax.f32 %v860, 0.0
        %v871 = vmax.f32 %v865, 0.0
        %v872 = vld [vmem:[%s7] sm:$0xff]
        %v873 = vld [vmem:[%s7 + $0x8] sm:$0xff]
        %v874 = vld [vmem:[%s7 + $0x10] sm:$0xff]
        %v875 = vld [vmem:[%s7 + $0x18] sm:$0xff]
        %877 = vset.pattern.permute.xlu0 0
        %878 = vperm.xlu0 %877, %v872
        %v879 = vpop.permute.xlu0 %878
        %882 = vset.pattern.permute.xlu0 0
        %883 = vperm.xlu0 %882, %v873
        %v884 = vpop.permute.xlu0 %883
        %887 = vset.pattern.permute.xlu0 0
        %888 = vperm.xlu0 %887, %v874
        %v889 = vpop.permute.xlu0 %888
        %892 = vset.pattern.permute.xlu0 0
        %893 = vperm.xlu0 %892, %v875
        %v894 = vpop.permute.xlu0 %893
        %v896 = vmul.f32 %v868, %v879
        %v897 = vmul.f32 %v869, %v884
        %v898 = vmul.f32 %v870, %v889
        %v899 = vmul.f32 %v871, %v894
        %v900 = vadd.f32 %v896, %v897
        %v901 = vadd.f32 %v900, %v898
        %v902 = vadd.f32 %v901, %v899
        %v903 = vrot.slane %v902, 4
        %v904 = vadd.f32 %v902, %v903
        %v905 = vrot.slane %v904, 2
        %v906 = vadd.f32 %v904, %v905
        %v907 = vrot.slane %v906, 1
        %v908 = vadd.f32 %v906, %v907
        %v909 = vld [vmem:[#allocation2] sm:$0x1]
        %911 = vset.pattern.permute.xlu0 0
        %912 = vperm.xlu0 %911, %v909
        %v913 = vpop.permute.xlu0 %912
        %v915 = vlaneseq
        %v916 = vshrl.u32 %v915, 7
        %v917 = vsub.s32 0, %v916
        %v918 = vrot.slane %v913, %v917
        %v919 = vadd.f32 %v908, %v918
        %v920 = vxor.u32 %v919, 2147483648
        %v921 = vmul.f32 %v920, 1.442695
        %v922 = vpow.pop %v921
        %v923 = vadd.f32 %v922, 1.0
        %v924 = vrcp.pop %v923
        %v925 = vmul.f32 1.0, %v924
        %926 = vst [vmem:[%s327] sm:$0x1] %v925
        %s927 = sand.u32 %s227, 1
        %s928 = scalar_lea.sflag [#allocation4], %s927
        %s929 = sand.u32 %s227, 1
        %s930 = scalar_lea.vmem [#allocation3], %s929
        // Predicated region
        $region57: #{tpu_custom_call.1} parent=55 // pred_check
          %p931 = pneg %p237
        $region58: #{tpu_custom_call.1} parent=55 // pred_check_branch
          %933 = sbr.rel (%p931) target = $region60
        $region59: #{tpu_custom_call.1} parent=55 // pred_region
          %s935 = ssub.s32 16, 16
          %936 = vsyncadd %s928, %s935
          %s937 = smul.addr %s25, 16
          %s938 = scalar_lea.hbm %s9, %s937
          %s940 = sshll.u32 %s930, 4
          %s941 = int_to_ptr.vmem [resolvable:$true] %s940
          %943 = dma.vmem_to_hbm [thread:$0]  %s941, 16, %s938, %s928
        $region60: #{tpu_custom_call.1} parent=55 // pred_fallthru
          _
      $region56: #{tpu_custom_call.1} parent=5 // pred_fallthru
        _
      %p944 = scmp.le.s32.totalorder 2, %s20
      // Predicated region
      $region61: #{tpu_custom_call.1} parent=5 // pred_check
        %p945 = pneg %p944
      $region62: #{tpu_custom_call.1} parent=5 // pred_check_branch
        %947 = sbr.rel (%p945) target = $region64
      $region63: #{tpu_custom_call.1} parent=5 // pred_region
        %s948 = ssub.s32 %s20, 2
        // Predicated region
        $region65: #{tpu_custom_call.1} parent=63 // pred_check
          %p949 = pneg %p243
        $region66: #{tpu_custom_call.1} parent=63 // pred_check_branch
          %951 = sbr.rel (%p949) target = $region68
        $region67: #{tpu_custom_call.1} parent=63 // pred_region
          %s952 = sand.u32 %s228, 1
          %s953 = scalar_lea.sflag [#allocation4], %s952
          %s954 = sand.u32 %s228, 1
          %s955 = scalar_lea.vmem [#allocation3], %s954
          %956 = dma.done %s953, 16
        $region68: #{tpu_custom_call.1} parent=63 // pred_fallthru
          _
      $region64: #{tpu_custom_call.1} parent=5 // pred_fallthru
        _
    $region6: #{tpu_custom_call.1} parent=1 // loop_footer
      %s24 = sadd.s32 1, %s20
    $region7: #{tpu_custom_call.1} parent=1 // loop_footer_branch
      %19 = sbr.rel target = $region3
    $region8: #{tpu_custom_call.1} parent=1 // loop_exit
      _
    %957 = vsyncpa [#allocation4], 1
    %s958 = scalar_lea.sflag [#allocation4], 1
    %959 = vsyncpa %s958, 1

</llo_original>
